<compile_context>
chip_gen: v7x
topology: tpu7x:2x2x1
jax: 0.10.0
libtpu: 0.0.40
codegen_flags: <defaults>
</compile_context>

<pallas_src>
import jax
import jax.numpy as jnp
from jax.experimental import pallas as pl
from jax.experimental.pallas import tpu as pltpu


def _head_matmul_kernel(w_ref, b_ref, x_ref, o_ref):
    # w_ref: (O, C)   b_ref: (O, 1) f32   x_ref: (C, tn)   o_ref: (O, tn)
    acc = jnp.dot(w_ref[...], x_ref[...], preferred_element_type=jnp.float32)
    o_ref[...] = (acc + b_ref[...]).astype(o_ref.dtype)


def fused_1x1_conv_nchw(x, w, b, *, out_dtype=None,
                        vmem_block_budget=14 << 20,
                        vmem_limit_bytes=32 << 20):
    """Fused 1x1 conv over all heads, native NCHW layout.

    x: (N, C, HW)   w: (O, C)   b: (O, 1) f32   ->   (N, O, HW) in out_dtype
    (out_dtype defaults to x.dtype; accumulation is always f32).
    """
    N, C, HW = x.shape
    O = w.shape[0]
    out_dtype = (jax.dtypes.canonicalize_dtype(out_dtype)
                 if out_dtype is not None else x.dtype)

    # --- Spatial tile selection ------------------------------------------
    # Double-buffered input + output block bytes per pixel; size the tile so
    # those blocks fit a ~14 MiB budget (safe with vmem_limit_bytes=32 MiB on
    # every generation: v5e/v6e 128 MiB physical, v7x 64 MiB physical).
    in_b = jax.dtypes.canonicalize_dtype(x.dtype).itemsize
    out_b = jax.dtypes.canonicalize_dtype(out_dtype).itemsize
    per_px = 2 * (C * in_b + O * out_b)
    cap = int(vmem_block_budget) // per_px
    cap = max(128, (min(cap, 32768) // 128) * 128)

    # Full H*W is always layout-legal; otherwise a large multiple of 128
    # (lane-dense stores, masked tail tile via the cdiv grid).
    tn = HW if HW <= cap else cap

    # v7x has 2 TensorCores and "parallel" grid axes shard across them: when
    # N == 1 make sure the grid keeps >= 2 steps so a core is not left idle.
    if N == 1 and HW >= 256:
        half = pl.cdiv(pl.cdiv(HW, 2), 128) * 128
        if half < HW:
            tn = min(tn, half)

    grid = (N, pl.cdiv(HW, tn))

    return pl.pallas_call(
        _head_matmul_kernel,
        out_shape=jax.ShapeDtypeStruct((N, O, HW), out_dtype),
        grid_spec=pltpu.PrefetchScalarGridSpec(
            num_scalar_prefetch=0,
            grid=grid,
            in_specs=[
                # Grid-invariant weights / bias (constant block index => the
                # pipeline does not re-fetch them every step).
                pl.BlockSpec((O, C), lambda n, j: (0, 0)),
                pl.BlockSpec((O, 1), lambda n, j: (0, 0)),
                # Feature map: batch squeezed, full C, lane-dense spatial tile.
                pl.BlockSpec((pl.Squeezed(), C, tn), lambda n, j: (n, 0, j)),
            ],
            out_specs=pl.BlockSpec((pl.Squeezed(), O, tn), lambda n, j: (n, 0, j)),
        ),
        compiler_params=pltpu.CompilerParams(
            dimension_semantics=("parallel", "parallel"),
            vmem_limit_bytes=vmem_limit_bytes,
        ),
    )(w, b, x)


class DefaultHeadPallas:
    """Mirror of second.pytorch.models.net_multi_head_balance.DefaultHead."""

    def __init__(self, num_filters, num_class, num_anchor_per_loc,
                 box_code_size, num_direction_bins, use_direction_classifier,
                 encode_background_as_zeros, key):
        self._num_anchor_per_loc = num_anchor_per_loc
        self._num_direction_bins = num_direction_bins
        self._num_class = num_class
        self._use_direction_classifier = use_direction_classifier
        self._box_code_size = box_code_size

        if encode_background_as_zeros:
            num_cls = num_anchor_per_loc * num_class
        else:
            num_cls = num_anchor_per_loc * (num_class + 1)
        self._num_cls = num_cls
        self._cls_per_anchor = num_cls // num_anchor_per_loc
        num_box = num_anchor_per_loc * box_code_size
        num_dir = num_anchor_per_loc * num_direction_bins

        # The single-transpose output path needs cls_per_anchor == num_class,
        # which holds exactly when background is encoded as zeros (the normal
        # configuration).  Otherwise fall back to the per-head PyTorch-view
        # mirror.
        self._fused_layout = bool(encode_background_as_zeros)
        self._k_sum = (self._cls_per_anchor + box_code_size
                       + (num_direction_bins if use_direction_classifier else 0))

        # Deterministic synthetic parameters; weights stored (O, C) = squeezed
        # nn.Conv2d(C, O, 1).weight, bias stored (O, 1).
        keys = jax.random.split(key, 6)
        scale = 1.0 / jnp.sqrt(num_filters)

        def mk_w(k, out_ch):
            return (jax.random.uniform(k, (out_ch, num_filters),
                                       jnp.float32, -1.0, 1.0) * scale)

        def mk_b(k, out_ch):
            return (jax.random.uniform(k, (out_ch, 1),
                                       jnp.float32, -1.0, 1.0) * scale)

        self.w_cls, self.b_cls = mk_w(keys[0], num_cls), mk_b(keys[1], num_cls)
        self.w_box, self.b_box = mk_w(keys[2], num_box), mk_b(keys[3], num_box)
        if use_direction_classifier:
            self.w_dir, self.b_dir = mk_w(keys[4], num_dir), mk_b(keys[5], num_dir)

        # ---- Precompute fused weights/bias once (cached, incl. dtype casts).
        A = num_anchor_per_loc
        cp, bc, db = self._cls_per_anchor, box_code_size, num_direction_bins
        if self._fused_layout:
            # Interleave rows per anchor: [cls | box | dir] for each anchor.
            w_parts, b_parts = [], []
            for a in range(A):
                w_parts.append(self.w_cls[a * cp:(a + 1) * cp])
                b_parts.append(self.b_cls[a * cp:(a + 1) * cp])
                w_parts.append(self.w_box[a * bc:(a + 1) * bc])
                b_parts.append(self.b_box[a * bc:(a + 1) * bc])
                if use_direction_classifier:
                    w_parts.append(self.w_dir[a * db:(a + 1) * db])
                    b_parts.append(self.b_dir[a * db:(a + 1) * db])
            self._w_all_f32 = jnp.concatenate(w_parts, axis=0)
            self._b_all_f32 = jnp.concatenate(b_parts, axis=0)
        else:
            self._w_all_f32 = jnp.concatenate(
                [self.w_cls, self.w_box]
                + ([self.w_dir] if use_direction_classifier else []), axis=0)
            self._b_all_f32 = jnp.concatenate(
                [self.b_cls, self.b_box]
                + ([self.b_dir] if use_direction_classifier else []), axis=0)
        self._w_cache = {}

    def _weights_for(self, dtype):
        dt = jax.dtypes.canonicalize_dtype(dtype)
        if dt not in self._w_cache:
            self._w_cache[dt] = self._w_all_f32.astype(dt)
        return self._w_cache[dt]

    def __call__(self, x_nchw, out_dtype=None):
        N, C, H, W = x_nchw.shape
        A = self._num_anchor_per_loc
        cp, bc = self._cls_per_anchor, self._box_code_size

        # NCHW -> (N, C, H*W): contiguous reshape, no transpose, no dtype cast.
        x3 = x_nchw.reshape(N, C, H * W)

        # Feed the MXU in the activation dtype (bf16 in => bf16 matmul);
        # accumulation + bias add stay f32 inside the kernel.  Weights are
        # cached per dtype; bias stays f32.
        y = fused_1x1_conv_nchw(x3, self._weights_for(x3.dtype),
                                self._b_all_f32, out_dtype=out_dtype)

        if self._fused_layout:
            # One reshape + ONE transpose of the whole fused output, then cheap
            # last-dim slices.  Element-for-element identical to PyTorch's
            # per-head view(N,A,k,H,W).permute(0,1,3,4,2).view(N,-1,k) because
            # the kernel's output rows are interleaved per anchor.
            K = self._k_sum
            t = y.reshape(N, A, K, H, W)
            t = jnp.transpose(t, (0, 1, 3, 4, 2))          # (N, A, H, W, K)
            t = t.reshape(N, A * H * W, K)
            ret = {
                'box_preds': t[..., cp:cp + bc],
                'cls_preds': t[..., :cp],
            }
            if self._use_direction_classifier:
                ret['dir_cls_preds'] = t[..., cp + bc:]
            return ret

        # Fallback (encode_background_as_zeros=False): mirror PyTorch's raw
        # view semantics head-by-head.
        o_cls = self._num_cls
        o_box = A * bc

        def to_preds(y_head, k_view, k_final):
            t = y_head.reshape(-1, A, k_view, H, W)
            t = jnp.transpose(t, (0, 1, 3, 4, 2))
            return t.reshape(N, -1, k_final)

        ret = {
            'box_preds': to_preds(y[:, o_cls:o_cls + o_box, :], bc, bc),
            'cls_preds': to_preds(y[:, :o_cls, :],
                                  self._num_class, self._num_class),
        }
        if self._use_direction_classifier:
            ret['dir_cls_preds'] = to_preds(
                y[:, o_cls + o_box:, :],
                self._num_direction_bins, self._num_direction_bins)
        return ret


if __name__ == "__main__":
    key = jax.random.PRNGKey(0)
    k_x, k_p = jax.random.split(key)

    # Small shapes consistent with the module.
    N, num_filters, H, W = 2, 64, 16, 16
    num_class, A, box_code, dir_bins = 3, 2, 7, 2

    head = DefaultHeadPallas(
        num_filters=num_filters,
        num_class=num_class,
        num_anchor_per_loc=A,
        box_code_size=box_code,
        num_direction_bins=dir_bins,
        use_direction_classifier=True,
        encode_background_as_zeros=True,
        key=k_p,
    )

    x = jax.random.normal(k_x, (N, num_filters, H, W), jnp.float32)
    out = head(x)
    jax.block_until_ready(out)

    # Plain-JAX reference of the same math (1x1 conv + view/permute).
    def ref_head(w, b, K):
        y = jnp.einsum('nchw,oc->nohw', x, w) + b.reshape(1, -1, 1, 1)
        y = y.reshape(N, A, K, H, W)
        return jnp.transpose(y, (0, 1, 3, 4, 2)).reshape(N, -1, K)

    ref_box = ref_head(head.w_box, head.b_box, box_code)
    ref_cls = ref_head(head.w_cls, head.b_cls, num_class)
    ref_dir = ref_head(head.w_dir, head.b_dir, dir_bins)

    assert out['box_preds'].shape == (N, A * H * W, box_code)
    assert out['cls_preds'].shape == (N, A * H * W, num_class)
    assert out['dir_cls_preds'].shape == (N, A * H * W, dir_bins)
    assert jnp.allclose(out['box_preds'], ref_box, atol=1e-3, rtol=1e-3)
    assert jnp.allclose(out['cls_preds'], ref_cls, atol=1e-3, rtol=1e-3)
    assert jnp.allclose(out['dir_cls_preds'], ref_dir, atol=1e-3, rtol=1e-3)

    # bf16 feature-map path (halved HBM read): dtype-preserving, f32 accumulate.
    out_bf16 = head(x.astype(jnp.bfloat16))
    jax.block_until_ready(out_bf16)
    assert out_bf16['box_preds'].dtype == jnp.bfloat16
    assert out_bf16['box_preds'].shape == (N, A * H * W, box_code)
    assert jnp.allclose(out_bf16['box_preds'].astype(jnp.float32), ref_box,
                        atol=0.25, rtol=0.05)

    # f32 in, bf16 out override (trims ~13% of kernel HBM traffic + halves the
    # bytes moved by the post-kernel transpose) — f32 accumulation preserved.
    out_mixed = head(x, out_dtype=jnp.bfloat16)
    jax.block_until_ready(out_mixed)
    assert out_mixed['cls_preds'].dtype == jnp.bfloat16
    assert jnp.allclose(out_mixed['cls_preds'].astype(jnp.float32), ref_cls,
                        atol=0.25, rtol=0.05)

    print("KERNEL_OK")
</pallas_src>

<mosaic_0001>
module attributes {stable_mosaic.version = 11 : i64} {
  func.func @_head_matmul_kernel(%arg0: i32, %arg1: i32, %arg2: memref<24x64xf32, #tpu.memory_space<vmem>>, %arg3: memref<24x1xf32, #tpu.memory_space<vmem>>, %arg4: memref<1x64x256xf32, #tpu.memory_space<vmem>>, %arg5: memref<1x24x256xf32, #tpu.memory_space<vmem>>) attributes {dimension_semantics = [#tpu.dimension_semantics<parallel>, #tpu.dimension_semantics<parallel>], iteration_bounds = array<i64: 2, 1>, scalar_prefetch = 0 : i64, scratch_operands = 0 : i64, tpu.core_type = #tpu.core_type<tc>, window_params = [{pipeline_mode = #tpu.pipeline_mode<synchronous>, transform_indices = @transform_0, window_bounds = array<i64: 24, 64>}, {pipeline_mode = #tpu.pipeline_mode<synchronous>, transform_indices = @transform_1, window_bounds = array<i64: 24, 1>}, {transform_indices = @transform_2, window_bounds = array<i64: 1, 64, 256>}, {transform_indices = @transform_3, window_bounds = array<i64: 1, 24, 256>}]} {
    %c0 = arith.constant 0 : index
    %c0_0 = arith.constant 0 : index
    %0 = vector.load %arg2[%c0, %c0_0] : memref<24x64xf32, #tpu.memory_space<vmem>>, vector<24x64xf32>
    %c0_1 = arith.constant 0 : index
    %c0_2 = arith.constant 0 : index
    %c0_3 = arith.constant 0 : index
    %1 = vector.load %arg4[%c0_1, %c0_2, %c0_3] : memref<1x64x256xf32, #tpu.memory_space<vmem>>, vector<1x64x256xf32>
    %2 = vector.shape_cast %1 : vector<1x64x256xf32> to vector<64x256xf32>
    %cst = arith.constant dense<0.000000e+00> : vector<24x256xf32>
    %3 = tpu.matmul %0, %2, %cst {dimension_numbers = #tpu.dot_dimension_numbers<[1], [0], [0], [1], [0, 0, 1, 1], [], []>} : vector<24x64xf32>, vector<64x256xf32>, vector<24x256xf32> -> vector<24x256xf32>
    %c0_4 = arith.constant 0 : index
    %c0_5 = arith.constant 0 : index
    %4 = vector.load %arg3[%c0_4, %c0_5] : memref<24x1xf32, #tpu.memory_space<vmem>>, vector<24x1xf32>
    %5 = vector.broadcast %4 : vector<24x1xf32> to vector<24x256xf32>
    %6 = arith.addf %3, %5 : vector<24x256xf32>
    %c0_6 = arith.constant 0 : index
    %c0_7 = arith.constant 0 : index
    %c0_8 = arith.constant 0 : index
    %7 = vector.load %arg5[%c0_6, %c0_7, %c0_8] : memref<1x24x256xf32, #tpu.memory_space<vmem>>, vector<1x24x256xf32>
    %8 = vector.shape_cast %7 : vector<1x24x256xf32> to vector<24x256xf32>
    %9 = vector.shape_cast %6 : vector<24x256xf32> to vector<1x24x256xf32>
    tpu.vector_store %arg5[%c0_6, %c0_7, %c0_8], %9 {strides = array<i32>} : memref<1x24x256xf32, #tpu.memory_space<vmem>>, vector<1x24x256xf32>,
    return
  }
  func.func @transform_0(%arg0: i32, %arg1: i32) -> (i32, i32) {
    %c0_i32 = arith.constant 0 : i32
    %c0_i32_0 = arith.constant 0 : i32
    %c0_i32_1 = arith.constant 0 : i32
    return %c0_i32, %c0_i32_0 : i32, i32
  }
  func.func @transform_1(%arg0: i32, %arg1: i32) -> (i32, i32) {
    %c0_i32 = arith.constant 0 : i32
    %c0_i32_0 = arith.constant 0 : i32
    %c0_i32_1 = arith.constant 0 : i32
    return %c0_i32, %c0_i32_0 : i32, i32
  }
  func.func @transform_2(%arg0: i32, %arg1: i32) -> (i32, i32, i32) {
    %c0_i32 = arith.constant 0 : i32
    %c0_i32_0 = arith.constant 0 : i32
    return %arg0, %c0_i32, %arg1 : i32, i32, i32
  }
  func.func @transform_3(%arg0: i32, %arg1: i32) -> (i32, i32, i32) {
    %c0_i32 = arith.constant 0 : i32
    %c0_i32_0 = arith.constant 0 : i32
    return %arg0, %c0_i32, %arg1 : i32, i32, i32
  }
}

</mosaic_0001>

<llo_original>
// kernel: tpu_custom_call.1
$region0: #{tpu_custom_call.1}
  #allocation0 [shape = 'u32[]', space=smem, size = 0x4, offset = 0x4, fixed_abs, tag = 'smem constant byte address 0x4 - core index']
  #allocation1 [shape = 'u32[144,128]{1,0:T(1,128)}', space=vmem, size = 0x12000, scoped, tag = 'internal scratch']
  %s0 = inlined_call_operand.vmem [shape: f32[24,64], index: 0, kind: input, shape index: {}]
  %s1 = inlined_call_operand.vmem [shape: f32[24,1], index: 1, kind: input, shape index: {}]
  %s2 = inlined_call_operand.hbm [shape: f32[2,64,256], index: 2, kind: input, shape index: {}]
  %s3 = inlined_call_operand.hbm [shape: f32[2,24,256], index: 3, kind: output, shape index: {}]
  %s4 = sld [smem:[#allocation0]]
  $region49: #{tpu_custom_call.1} parent=0
    _
  %s6 = ssub.s32 1, %s4
  %s7 = scalar_select 0, %s6, %s4
  $region1: #{tpu_custom_call.1} parent=0
    #allocation2 [shape = 'u8[131072]{0}', space=vmem, size = 0x20000, scoped, tag = 'input window, operand 2']
    #allocation3 [shape = 's32[2]{0}', space=sflag, size = 0x8, scoped, tag = 'scoped memory for tpu_custom_call.1']
    #allocation4 [shape = 's32[2]{0}', space=sflag, size = 0x8, scoped, tag = 'scoped memory for tpu_custom_call.1']
    #allocation5 [shape = 'u8[49152]{0}', space=vmem, size = 0xc000, scoped, tag = 'output window, operand 0']
    %8 = vsyncpa [#allocation3], 0
    %s9 = scalar_lea.sflag [#allocation3], 1
    %10 = vsyncpa %s9, 0
    %11 = vsyncpa [#allocation4], 0
    %s12 = scalar_lea.sflag [#allocation4], 1
    %13 = vsyncpa %s12, 0
    loop: start=0, step=1, limit=4
    $region2: #{tpu_custom_call.1} parent=1 // loop_pre_header
      _
    $region3: #{tpu_custom_call.1} parent=1 // loop_header
      %s15 = sphi 0, %s19
      %p16 = scmp.ge.s32.totalorder %s15, 4
      %s22 = sphi 0, %s34
      %s23 = sphi 0, %s30
      %s24 = sphi 0, %s22
      %s25 = sphi 0, %s23
      %s26 = sphi 0, %s24
      %s27 = sphi 0, %s25
      %s35 = sphi 0, %s35
      %s37 = sphi 0, %s35
      %s38 = sphi 0, %s37
      %s52 = sphi 0, %s38
      %s56 = sphi 0, %s56
      %s58 = sphi 0, %s56
      %s59 = sphi 0, %s58
      %s73 = sphi 0, %s59
      %s81 = sphi 0, %s83
      %s84 = sphi 0, %s81
      %s85 = sphi 0, %s84
      %s101 = sphi 0, %s85
      %s109 = sphi 0, %s111
      %s112 = sphi 0, %s109
      %s113 = sphi 0, %s112
      %s129 = sphi 0, %s113
    $region4: #{tpu_custom_call.1} parent=1 // loop_header_branch
      %18 = sbr.rel (%p16) target = $region8
    $region5: #{tpu_custom_call.1} parent=1 // loop_body
      %s20 = ssub.s32 %s15, 1
      %s21 = ssub.s32 %s15, 2
      %s28 = sadd.s32 1, %s23
      %p29 = scmp.ge.s32.totalorder %s28, 1
      %s30 = scalar_select %p29, 0, %s28
      %s31 = sadd.s32 1, %s22
      %s32 = scalar_select %p29, %s31, %s22
      %p33 = scmp.ge.s32.totalorder %s32, 2
      %s34 = scalar_select %p33, 0, %s32
      %s36 = sadd.s32 %s35, 1
      %p39 = scmp.eq.s32.totalorder %s15, 1
      %p40 = scmp.ne.s32.totalorder %s35, %s37
      %p41 = scmp.eq.s32.totalorder %s15, 0
      %p42 = por %p40, %p41
      %p43 = scmp.ne.s32.totalorder %s35, %s37
      %p44 = scmp.eq.s32.totalorder %s20, 1
      %p45 = por %p43, %p44
      %p46 = scmp.ne.s32.totalorder %s37, %s38
      %p47 = scmp.eq.s32.totalorder %s20, 0
      %p48 = por %p46, %p47
      %p49 = scmp.ne.s32.totalorder %s37, %s38
      %p50 = scmp.eq.s32.totalorder %s21, 1
      %p51 = por %p49, %p50
      %p53 = scmp.ne.s32.totalorder %s38, %s52
      %p54 = scmp.eq.s32.totalorder %s21, 0
      %p55 = por %p53, %p54
      %s57 = sadd.s32 %s56, 1
      %p60 = scmp.eq.s32.totalorder %s15, 1
      %p61 = scmp.ne.s32.totalorder %s56, %s58
      %p62 = scmp.eq.s32.totalorder %s15, 0
      %p63 = por %p61, %p62
      %p64 = scmp.ne.s32.totalorder %s56, %s58
      %p65 = scmp.eq.s32.totalorder %s20, 1
      %p66 = por %p64, %p65
      %p67 = scmp.ne.s32.totalorder %s58, %s59
      %p68 = scmp.eq.s32.totalorder %s20, 0
      %p69 = por %p67, %p68
      %p70 = scmp.ne.s32.totalorder %s58, %s59
      %p71 = scmp.eq.s32.totalorder %s21, 1
      %p72 = por %p70, %p71
      %p74 = scmp.ne.s32.totalorder %s59, %s73
      %p75 = scmp.eq.s32.totalorder %s21, 0
      %p76 = por %p74, %p75
      %s77 = ssub.s32 %s22, %s34
      %s78 = ssub.s32 %s23, %s30
      %s79 = sor.u32 %s77, %s78
      %p80 = scmp.eq.s32.totalorder %s79, 0
      %s82 = sadd.s32 %s81, 1
      %s83 = scalar_select %p80, %s81, %s82
      %p86 = pneg %p80
      %p87 = scmp.eq.s32.totalorder %s15, 1
      %p88 = por %p86, %p87
      %p89 = scmp.ne.s32.totalorder %s81, %s84
      %p90 = scmp.eq.s32.totalorder %s15, 0
      %p91 = por %p89, %p90
      %p92 = scmp.ne.s32.totalorder %s81, %s84
      %p93 = scmp.eq.s32.totalorder %s20, 1
      %p94 = por %p92, %p93
      %p95 = scmp.ne.s32.totalorder %s84, %s85
      %p96 = scmp.eq.s32.totalorder %s20, 0
      %p97 = por %p95, %p96
      %p98 = scmp.ne.s32.totalorder %s84, %s85
      %p99 = scmp.eq.s32.totalorder %s21, 1
      %p100 = por %p98, %p99
      %p102 = scmp.ne.s32.totalorder %s85, %s101
      %p103 = scmp.eq.s32.totalorder %s21, 0
      %p104 = por %p102, %p103
      %s105 = ssub.s32 %s22, %s34
      %s106 = ssub.s32 %s23, %s30
      %s107 = sor.u32 %s105, %s106
      %p108 = scmp.eq.s32.totalorder %s107, 0
      %s110 = sadd.s32 %s109, 1
      %s111 = scalar_select %p108, %s109, %s110
      %p114 = pneg %p108
      %p115 = scmp.eq.s32.totalorder %s15, 1
      %p116 = por %p114, %p115
      %p117 = scmp.ne.s32.totalorder %s109, %s112
      %p118 = scmp.eq.s32.totalorder %s15, 0
      %p119 = por %p117, %p118
      %p120 = scmp.ne.s32.totalorder %s109, %s112
      %p121 = scmp.eq.s32.totalorder %s20, 1
      %p122 = por %p120, %p121
      %p123 = scmp.ne.s32.totalorder %s112, %s113
      %p124 = scmp.eq.s32.totalorder %s20, 0
      %p125 = por %p123, %p124
      %p126 = scmp.ne.s32.totalorder %s112, %s113
      %p127 = scmp.eq.s32.totalorder %s21, 1
      %p128 = por %p126, %p127
      %p130 = scmp.ne.s32.totalorder %s113, %s129
      %p131 = scmp.eq.s32.totalorder %s21, 0
      %p132 = por %p130, %p131
      %p133 = scmp.le.s32.totalorder 1, %s15
      %p134 = scmp.lt.s32.totalorder %s15, 3
      %p135 = pnand %p133, %p134
      %p136 = pneg %p135
      // Predicated region
      $region9: #{tpu_custom_call.1} parent=5 // pred_check
        _
      $region10: #{tpu_custom_call.1} parent=5 // pred_check_branch
        %138 = sbr.rel (%p135) target = $region12
      $region11: #{tpu_custom_call.1} parent=5 // pred_region
        %s139 = ssub.s32 %s15, 1
        // Predicated region
        $region13: #{tpu_custom_call.1} parent=11 // pred_check
          %p140 = pneg %p48
        $region14: #{tpu_custom_call.1} parent=11 // pred_check_branch
          %142 = sbr.rel (%p140) target = $region16
        $region15: #{tpu_custom_call.1} parent=11 // pred_region
          _
        $region16: #{tpu_custom_call.1} parent=11 // pred_fallthru
          _
        // Predicated region
        $region17: #{tpu_custom_call.1} parent=11 // pred_check
          %p143 = pneg %p69
        $region18: #{tpu_custom_call.1} parent=11 // pred_check_branch
          %145 = sbr.rel (%p143) target = $region20
        $region19: #{tpu_custom_call.1} parent=11 // pred_region
          _
        $region20: #{tpu_custom_call.1} parent=11 // pred_fallthru
          _
      $region12: #{tpu_custom_call.1} parent=5 // pred_fallthru
        _
      %p146 = scmp.lt.s32.totalorder %s15, 2
      // Predicated region
      $region21: #{tpu_custom_call.1} parent=5 // pred_check
        %p147 = pneg %p146
      $region22: #{tpu_custom_call.1} parent=5 // pred_check_branch
        %149 = sbr.rel (%p147) target = $region24
      $region23: #{tpu_custom_call.1} parent=5 // pred_region
        // Predicated region
        $region25: #{tpu_custom_call.1} parent=23 // pred_check
          %p150 = pneg %p91
        $region26: #{tpu_custom_call.1} parent=23 // pred_check_branch
          %152 = sbr.rel (%p150) target = $region28
        $region27: #{tpu_custom_call.1} parent=23 // pred_region
          %s153 = sand.u32 %s81, 1
          %s154 = scalar_lea.sflag [#allocation3], %s153
          %s155 = sand.u32 %s81, 1
          %s156 = smul.addr %s155, 128
          %s157 = scalar_lea.vmem [#allocation2], %s156
          %s158 = smul.u32 2, %s23
          %s160 = ssub.s32 2048, 2048
          %161 = vsyncadd %s154, %s160
          %s162 = smul.addr %s22, 16
          %s163 = sadd.s32 %s158, %s162
          %s164 = smul.addr %s163, 128
          %s165 = scalar_lea.hbm %s2, %s164
          %s166 = sshll.u32 %s157, 4
          %s167 = int_to_ptr.vmem [resolvable:$true] %s166
          %172 = dma.hbm_to_vmem [thread:$0]  %s165, 2048, %s167, %s154, 256, 256, 16
        $region28: #{tpu_custom_call.1} parent=23 // pred_fallthru
          _
      $region24: #{tpu_custom_call.1} parent=5 // pred_fallthru
        _
      %p173 = scmp.le.s32.totalorder 1, %s15
      %p174 = scmp.lt.s32.totalorder %s15, 3
      %p175 = pnand %p173, %p174
      %p176 = pneg %p175
      // Predicated region
      $region29: #{tpu_custom_call.1} parent=5 // pred_check
        _
      $region30: #{tpu_custom_call.1} parent=5 // pred_check_branch
        %178 = sbr.rel (%p175) target = $region32
      $region31: #{tpu_custom_call.1} parent=5 // pred_region
        %s179 = ssub.s32 %s15, 1
        %s180 = sand.u32 %s84, 1
        %s181 = scalar_lea.sflag [#allocation3], %s180
        %s182 = sand.u32 %s84, 1
        %s183 = smul.addr %s182, 128
        %s184 = scalar_lea.vmem [#allocation2], %s183
        // Predicated region
        $region33: #{tpu_custom_call.1} parent=31 // pred_check
          %p185 = pneg %p97
        $region34: #{tpu_custom_call.1} parent=31 // pred_check_branch
          %187 = sbr.rel (%p185) target = $region36
        $region35: #{tpu_custom_call.1} parent=31 // pred_region
          %188 = dma.done %s181, 2048
        $region36: #{tpu_custom_call.1} parent=31 // pred_fallthru
          _
        %p189 = pneg %p48
        %p190 = pneg %p45
        %p191 = pneg %p69
        %p192 = pneg %p66
        %s193 = sand.u32 %s84, 1
        %s194 = scalar_lea.sflag [#allocation3], %s193
        %s195 = sand.u32 %s84, 1
        %s196 = smul.addr %s195, 128
        %s197 = scalar_lea.vmem [#allocation2], %s196
        %p198 = pneg %p97
        %p199 = pneg %p94
        %p200 = pneg %p125
        %p201 = pneg %p122
        %s202 = sand.u32 %s112, 1
        %s203 = scalar_lea.sflag [#allocation4], %s202
        %s204 = sand.u32 %s112, 1
        %s205 = smul.addr %s204, 48
        %s206 = scalar_lea.vmem [#allocation5], %s205
        %s207 = smul.u32 2, %s25
        %s208 = smul.u32 2, %s25
        %v209 = vld [vmem:[%s0] sm:$0xff]
        %v210 = vld [vmem:[%s0 + $0x8] sm:$0xff]
        %v211 = vld [vmem:[%s0 + $0x10] sm:$0xff]
        %v212 = vld [vmem:[%s184] sm:$0xff]
        %v213 = vld [vmem:[%s184 + $0x8] sm:$0xff]
        %v214 = vld [vmem:[%s184 + $0x10] sm:$0xff]
        %v215 = vld [vmem:[%s184 + $0x18] sm:$0xff]
        %v216 = vld [vmem:[%s184 + $0x20] sm:$0xff]
        %v217 = vld [vmem:[%s184 + $0x28] sm:$0xff]
        %v218 = vld [vmem:[%s184 + $0x30] sm:$0xff]
        %v219 = vld [vmem:[%s184 + $0x38] sm:$0xff]
        %v220 = vld [vmem:[%s184 + $0x40] sm:$0xff]
        %v221 = vld [vmem:[%s184 + $0x48] sm:$0xff]
        %v222 = vld [vmem:[%s184 + $0x50] sm:$0xff]
        %v223 = vld [vmem:[%s184 + $0x58] sm:$0xff]
        %v224 = vld [vmem:[%s184 + $0x60] sm:$0xff]
        %v225 = vld [vmem:[%s184 + $0x68] sm:$0xff]
        %v226 = vld [vmem:[%s184 + $0x70] sm:$0xff]
        %v227 = vld [vmem:[%s184 + $0x78] sm:$0xff]
        %v228 = vld [vmem:[%s1] sm:$0xff]
        %v229 = vld [vmem:[%s1 + $0x8] sm:$0xff]
        %v230 = vld [vmem:[%s1 + $0x10] sm:$0xff]
        %232 = vset.pattern.permute.xlu0 0
        %233 = vperm.xlu0 %232, %v228
        %v234 = vpop.permute.xlu0 %233
        %237 = vset.pattern.permute.xlu0 0
        %238 = vperm.xlu0 %237, %v229
        %v239 = vpop.permute.xlu0 %238
        %242 = vset.pattern.permute.xlu0 0
        %243 = vperm.xlu0 %242, %v230
        %v244 = vpop.permute.xlu0 %243
        %vm246 = vcmask 523264
        %v248 = vsel %vm246, %v209, 0
        %v251 = vsel %vm246, %v210, 0
        %v254 = vsel %vm246, %v211, 0
        %256 = vmatprep.subr.mxu0 %v213
        %257 = vmatpush1.msra.mxu0 %v212
        %258 = vmatprep.subr.mxu0 %v215
        %259 = vmatpush1.msra.mxu0 %v214
        %260 = vmatprep.subr.mxu0 %v217
        %261 = vmatpush1.msra.mxu0 %v216
        %262 = vmatprep.subr.mxu0 %v219
        %263 = vmatpush1.msra.mxu0 %v218
        %264 = vmatprep.subr.mxu0 %v221
        %265 = vmatpush1.msra.mxu0 %v220
        %266 = vmatprep.subr.mxu0 %v223
        %267 = vmatpush1.msra.mxu0 %v222
        %268 = vmatprep.subr.mxu0 %v225
        %269 = vmatpush1.msra.mxu0 %v224
        %270 = vmatprep.subr.mxu0 %v227
        %271 = vmatpush1.msra.mxu0 %v226
        %272 = vmatprep.subr.mxu0 0.0
        %273 = vmatpush1.msra.mxu0 0.0
        %274 = vmatprep.subr.mxu0 0.0
        %275 = vmatpush1.msra.mxu0 0.0
        %276 = vmatprep.subr.mxu0 0.0
        %277 = vmatpush1.msra.mxu0 0.0
        %278 = vmatprep.subr.mxu0 0.0
        %279 = vmatpush1.msra.mxu0 0.0
        %280 = vmatprep.subr.mxu0 0.0
        %281 = vmatpush1.msra.mxu0 0.0
        %282 = vmatprep.subr.mxu0 0.0
        %283 = vmatpush1.msra.mxu0 0.0
        %284 = vmatprep.subr.mxu0 0.0
        %285 = vmatpush1.msra.mxu0 0.0
        %286 = vmatprep.subr.mxu0 0.0
        %287 = vmatpush1.msra.mxu0 0.0
        %288 = vmatprep.subr.mxu0 0.0
        %289 = vmatpush1.msra.mxu0 0.0
        %290 = vmatprep.subr.mxu0 0.0
        %291 = vmatpush1.msra.mxu0 0.0
        %292 = vmatprep.subr.mxu0 0.0
        %293 = vmatpush1.msra.mxu0 0.0
        %294 = vmatprep.subr.mxu0 0.0
        %295 = vmatpush1.msra.mxu0 0.0
        %296 = vmatprep.subr.mxu0 0.0
        %297 = vmatpush1.msra.mxu0 0.0
        %298 = vmatprep.subr.mxu0 0.0
        %299 = vmatpush1.msra.mxu0 0.0
        %300 = vmatprep.subr.mxu0 0.0
        %301 = vmatpush1.msra.mxu0 0.0
        %302 = vmatprep.subr.mxu0 0.0
        %303 = vmatpush1.msra.mxu0 0.0
        %304 = vmatprep.subr.mxu0 0.0
        %305 = vmatpush1.msra.mxu0 0.0
        %306 = vmatprep.subr.mxu0 0.0
        %307 = vmatpush1.msra.mxu0 0.0
        %308 = vmatprep.subr.mxu0 0.0
        %309 = vmatpush1.msra.mxu0 0.0
        %310 = vmatprep.subr.mxu0 0.0
        %311 = vmatpush1.msra.mxu0 0.0
        %312 = vmatprep.subr.mxu0 0.0
        %313 = vmatpush1.msra.mxu0 0.0
        %314 = vmatprep.subr.mxu0 0.0
        %315 = vmatpush1.msra.mxu0 0.0
        %316 = vmatprep.subr.mxu0 0.0
        %317 = vmatpush1.msra.mxu0 0.0
        %318 = vmatprep.subr.mxu0 0.0
        %319 = vmatpush1.msra.mxu0 0.0
        %320 = vmatprep.mubr.f32.mxu0 0.0
        %321 = vmatmul.mubr.f32.gmra.mrb[0].mxu0 %v248
        %v322 = vpop.f32.mrb[0].mxu0
        %v323 = vadd.f32 %v234, %v322
        %v324 = vpop.f32.mrb[0].mxu0
        %v325 = vadd.f32 %v234, %v324
        %326 = vmatprep.mubr.f32.mxu0 0.0
        %327 = vmatmul.mubr.f32.gmra.mrb[0].mxu0 %v251
        %v328 = vpop.f32.mrb[0].mxu0
        %v329 = vadd.f32 %v239, %v328
        %v330 = vpop.f32.mrb[0].mxu0
        %v331 = vadd.f32 %v239, %v330
        %332 = vmatprep.mubr.f32.mxu0 0.0
        %333 = vmatmul.mubr.f32.gmra.mrb[0].mxu0 %v254
        %v334 = vpop.f32.mrb[0].mxu0
        %v335 = vadd.f32 %v244, %v334
        %v336 = vpop.f32.mrb[0].mxu0
        %v337 = vadd.f32 %v244, %v336
        %338 = vdwg.mxu0
        %339 = vst [vmem:[%s206] sm:$0xff] %v323
        %340 = vst [vmem:[%s206 + $0x8] sm:$0xff] %v325
        %341 = vst [vmem:[%s206 + $0x10] sm:$0xff] %v329
        %342 = vst [vmem:[%s206 + $0x18] sm:$0xff] %v331
        %343 = vst [vmem:[%s206 + $0x20] sm:$0xff] %v335
        %344 = vst [vmem:[%s206 + $0x28] sm:$0xff] %v337
        %s345 = sand.u32 %s112, 1
        %s346 = scalar_lea.sflag [#allocation4], %s345
        %s347 = sand.u32 %s112, 1
        %s348 = smul.addr %s347, 48
        %s349 = scalar_lea.vmem [#allocation5], %s348
        // Predicated region
        $region37: #{tpu_custom_call.1} parent=31 // pred_check
          %p350 = pneg %p122
        $region38: #{tpu_custom_call.1} parent=31 // pred_check_branch
          %352 = sbr.rel (%p350) target = $region40
        $region39: #{tpu_custom_call.1} parent=31 // pred_region
          %s353 = smul.u32 2, %s25
          %s355 = ssub.s32 768, 768
          %356 = vsyncadd %s346, %s355
          %s357 = smul.addr %s24, 6
          %s358 = sadd.s32 %s353, %s357
          %s359 = smul.addr %s358, 128
          %s360 = scalar_lea.hbm %s3, %s359
          %s361 = sshll.u32 %s349, 4
          %s362 = int_to_ptr.vmem [resolvable:$true] %s361
          %367 = dma.vmem_to_hbm [thread:$0]  %s362, 768, %s360, %s346, 256, 256, 16
        $region40: #{tpu_custom_call.1} parent=31 // pred_fallthru
          _
      $region32: #{tpu_custom_call.1} parent=5 // pred_fallthru
        _
      %p368 = scmp.le.s32.totalorder 2, %s15
      // Predicated region
      $region41: #{tpu_custom_call.1} parent=5 // pred_check
        %p369 = pneg %p368
      $region42: #{tpu_custom_call.1} parent=5 // pred_check_branch
        %371 = sbr.rel (%p369) target = $region44
      $region43: #{tpu_custom_call.1} parent=5 // pred_region
        %s372 = ssub.s32 %s15, 2
        // Predicated region
        $region45: #{tpu_custom_call.1} parent=43 // pred_check
          %p373 = pneg %p128
        $region46: #{tpu_custom_call.1} parent=43 // pred_check_branch
          %375 = sbr.rel (%p373) target = $region48
        $region47: #{tpu_custom_call.1} parent=43 // pred_region
          %s376 = sand.u32 %s113, 1
          %s377 = scalar_lea.sflag [#allocation4], %s376
          %s378 = sand.u32 %s113, 1
          %s379 = smul.addr %s378, 48
          %s380 = scalar_lea.vmem [#allocation5], %s379
          %381 = dma.done %s377, 768
        $region48: #{tpu_custom_call.1} parent=43 // pred_fallthru
          _
      $region44: #{tpu_custom_call.1} parent=5 // pred_fallthru
        _
    $region6: #{tpu_custom_call.1} parent=1 // loop_footer
      %s19 = sadd.s32 1, %s15
    $region7: #{tpu_custom_call.1} parent=1 // loop_footer_branch
      %14 = sbr.rel target = $region3
    $region8: #{tpu_custom_call.1} parent=1 // loop_exit
      _
    %382 = vsyncpa [#allocation3], 1
    %s383 = scalar_lea.sflag [#allocation3], 1
    %384 = vsyncpa %s383, 1
    %385 = vsyncpa [#allocation4], 1
    %s386 = scalar_lea.sflag [#allocation4], 1
    %387 = vsyncpa %s386, 1

</llo_original>
